<compile_context>
chip_gen: v6e
topology: v6e:2x2x1
jax: 0.10.0
libtpu: 0.0.40
codegen_flags: <defaults>
</compile_context>

<pallas_src>
import functools

import jax
import jax.numpy as jnp
from jax import lax
from jax.experimental import pallas as pl
from jax.experimental.pallas import tpu as pltpu


# Hand-rolled activations (exp/log/abs/max only) so they lower cleanly in Mosaic.
def _softplus(x):
    return jnp.maximum(x, 0.0) + jnp.log(1.0 + jnp.exp(-jnp.abs(x)))


def _sigmoid(x):
    return 1.0 / (1.0 + jnp.exp(-x))


# --------------------------------------------------------------------------
# Fused recurrent kernel: each grid step == one HeadBase.forward() call
#   fc -> unpack -> content weight -> interp -> shift -> sharpen -> read
# Head state (prev_w, prev_read) lives in VMEM scratch across grid steps,
# so the whole T-step recurrence is a single launch + a handful of DMAs.
# --------------------------------------------------------------------------
def _head_seq_kernel(h_ref, w_aug_ref, mem_ref, init_ref,
                     w_out_ref, r_out_ref,
                     x_buf, w_state, inv_m,
                     *, H, M, N, max_shift):
    t = pl.program_id(0)
    B = x_buf.shape[0]
    n_s = 2 * max_shift + 1
    eps = 1e-8  # F.cosine_similarity eps
    # TODO(synk): recent torch clamps the *product* of the two norms; this
    # clamps each factor separately (differs only for near-zero vectors).

    # ---- one-time init (step 0): head state + hoisted memory row norms ------
    @pl.when(t == 0)
    def _init():
        # fc-input buffer layout: [ h | prev_read | 1 ]  (bias folded into W_aug)
        x_buf[:, H:H + M] = init_ref[:, :M]                       # prev_read_0
        x_buf[:, H + M:H + M + 1] = jnp.ones((B, 1), jnp.float32)
        w_state[...] = init_ref[:, M:]                            # prev_w_0
        mem0 = mem_ref[...]
        # hoisted: 1 / max(||memory[b,n,:]||, eps), reused every step (EUP rsqrt)
        inv_m[...] = lax.rsqrt(
            jnp.maximum(jnp.sum(mem0 * mem0, axis=2), eps * eps))

    # ---- fc: packed = [h_t, prev_read, 1] @ W_aug  (single MXU push) --------
    x_buf[:, :H] = h_ref[0]
    packed = jnp.dot(x_buf[...], w_aug_ref[...],
                     preferred_element_type=jnp.float32)          # (B, D_out)

    # ---- unpack_hidden_state -------------------------------------------------
    # TODO(synk): hidden_state_unpacking_scheme() is abstract in HeadBase; the
    # canonical NTM scheme is assumed: k/tanh, beta/softplus, g/sigmoid,
    # s/softmax, gamma/1+softplus.
    k = jnp.tanh(packed[:, :M])                                   # (B, M)
    # Single unaligned lane slice for the scalar tail; re-slice the small tile.
    tail = packed[:, M:M + 3 + n_s]                               # (B, 3+n_s)
    beta = _softplus(tail[:, 0:1])                                # (B, 1)
    g = _sigmoid(tail[:, 1:2])                                    # (B, 1)
    s_logits = tail[:, 2:2 + n_s]
    s_logits = s_logits - jnp.max(s_logits, axis=1, keepdims=True)
    s_e = jnp.exp(s_logits)
    s = s_e / jnp.sum(s_e, axis=1, keepdims=True)                 # (B, n_s)
    gamma = 1.0 + _softplus(tail[:, 2 + n_s:3 + n_s])             # (B, 1)

    # ---- _content_weight: cosine similarity over M, softmax over N ----------
    mem = mem_ref[...]                                            # (B, N, M)
    dot = jnp.sum(mem * k[:, None, :], axis=2)                    # (B, N)
    inv_k = lax.rsqrt(jnp.maximum(jnp.sum(k * k, axis=1, keepdims=True),
                                  eps * eps))
    sim = dot * inv_k * inv_m[...]                                # (B, N)
    logits = beta * sim
    logits = logits - jnp.max(logits, axis=1, keepdims=True)
    e = jnp.exp(logits)
    # Exact divide: an approximate reciprocal error here would NOT renormalize
    # away (w_c is gated with prev_w before the sharpen normalization).
    w_c = e / jnp.sum(e, axis=1, keepdims=True)

    # ---- _gated_interpolation -------------------------------------------------
    w_g = g * w_c + (1.0 - g) * w_state[...]                      # (B, N)

    # ---- _mod_shift: circular pad by max_shift, cross-correlate with s --------
    # Identical to the PyTorch conv1d diagonal selection (static unroll; N is
    # far from 128 so pltpu.roll is not applicable here).
    unrolled = jnp.concatenate(
        [w_g[:, N - max_shift:], w_g, w_g[:, :max_shift]], axis=1)  # (B, N+2ms)
    w_s = s[:, 0:1] * unrolled[:, 0:N]
    for j in range(1, n_s):                                       # static unroll
        w_s = w_s + s[:, j:j + 1] * unrolled[:, j:j + N]

    # ---- _sharpen: w^gamma / (sum + 1e-16) -------------------------------------
    # Clamp before log so an underflowed lane cannot emit -inf (matches
    # torch.pow's 0**gamma == 0 to within f32 underflow).
    w_pow = jnp.exp(gamma * jnp.log(jnp.maximum(w_s, 1e-38)))
    w = w_pow / (jnp.sum(w_pow, axis=1, keepdims=True) + 1e-16)   # (B, N)

    # ---- fused read vector (memory already resident in VMEM) -------------------
    read = jnp.sum(w[:, :, None] * mem, axis=1)                   # (B, M)

    # ---- emit this step + carry state into the next grid iteration -------------
    w_out_ref[0] = w
    r_out_ref[0] = read
    w_state[...] = w
    x_buf[:, H:H + M] = read          # becomes prev_read for step t+1


# --------------------------------------------------------------------------
# Wrapper: one pallas_call for the whole T-step head recurrence
# --------------------------------------------------------------------------
@functools.partial(jax.jit, static_argnames=("M", "max_shift"))
def head_forward_seq(h_seq, memory, prev_read0, prev_w0, W, bias, *, M, max_shift):
    T, B, H = h_seq.shape
    _, N, _ = memory.shape
    D_out = W.shape[1]
    # Fold the bias into the weight (one augmented matmul in-kernel).
    w_aug = jnp.concatenate([W, bias[None, :]], axis=0).astype(jnp.float32)  # (H+M+1, D_out)
    # Pack the per-head initial state into one operand (single DMA).
    init_state = jnp.concatenate([prev_read0, prev_w0], axis=1)              # (B, M+N)

    kernel = functools.partial(_head_seq_kernel, H=H, M=M, N=N, max_shift=max_shift)

    # Scaling notes (not exercised at these toy shapes):
    #  - Stack multiple heads (per-head W_aug along a leading axis) or bigger B
    #    into the grid; then make the output slab lane-dense (last dim a
    #    multiple of 128) instead of many (B, 16) masked stores.
    #  - v7x: add a "parallel" batch axis to shard over the 2 TensorCores and
    #    re-size the resident memory block against 64 MiB VMEM (half of v6e);
    #    consider pipeline_mode=pl.Buffered(3) on the streamed h operand.
    #  - v5e: if memory is stored bf16 at scale, upcast to f32 right after the
    #    VMEM load (no bf16 VPU/EUP on v5e).
    return pl.pallas_call(
        kernel,
        out_shape=(jax.ShapeDtypeStruct((T, B, N), jnp.float32),   # weights per step
                   jax.ShapeDtypeStruct((T, B, M), jnp.float32)),  # reads per step
        grid_spec=pltpu.PrefetchScalarGridSpec(
            num_scalar_prefetch=0,
            grid=(T,),
            in_specs=[
                pl.BlockSpec((1, B, H), lambda t: (t, 0, 0)),        # h_t streamed
                pl.BlockSpec((H + M + 1, D_out), lambda t: (0, 0)),  # W_aug: DMA'd once
                pl.BlockSpec((B, N, M), lambda t: (0, 0, 0)),        # memory resident
                pl.BlockSpec((B, M + N), lambda t: (0, 0)),          # init state, once
            ],
            out_specs=[
                pl.BlockSpec((1, B, N), lambda t: (t, 0, 0)),
                pl.BlockSpec((1, B, M), lambda t: (t, 0, 0)),
            ],
            scratch_shapes=[
                pltpu.VMEM((B, H + M + 1), jnp.float32),   # fc input [h | read | 1]
                pltpu.VMEM((B, N), jnp.float32),           # carried prev_w
                pltpu.VMEM((B, N), jnp.float32),           # hoisted 1/||mem row||
            ],
        ),
        compiler_params=pltpu.CompilerParams(
            dimension_semantics=("arbitrary",)),   # recurrent axis: state carried
    )(h_seq, w_aug, memory, init_state)


def head_step(h, prev_read, memory, prev_w, W, bias, *, M, max_shift):
    """Single HeadBase.forward()-style step (the T == 1 grid of the same kernel)."""
    w_seq, r_seq = head_forward_seq(h[None], memory, prev_read, prev_w, W, bias,
                                    M=M, max_shift=max_shift)
    return w_seq[0], r_seq[0]


# --------------------------------------------------------------------------
# Pure-JAX reference (mirrors the PyTorch HeadBase math, exact divides)
# --------------------------------------------------------------------------
def head_step_ref(h, prev_read, memory, prev_w, W, bias, *, M, max_shift):
    x = jnp.concatenate([h, prev_read], axis=1)
    packed = x @ W + bias
    n_s = 2 * max_shift + 1
    k = jnp.tanh(packed[:, :M])
    beta = jax.nn.softplus(packed[:, M:M + 1])
    g = jax.nn.sigmoid(packed[:, M + 1:M + 2])
    s = jax.nn.softmax(packed[:, M + 2:M + 2 + n_s], axis=1)
    gamma = 1.0 + jax.nn.softplus(packed[:, M + 2 + n_s:M + 3 + n_s])

    eps = 1e-8
    dot = jnp.einsum("bnm,bm->bn", memory, k)
    k_n = jnp.maximum(jnp.linalg.norm(k, axis=1, keepdims=True), eps)
    m_n = jnp.maximum(jnp.linalg.norm(memory, axis=2), eps)
    w_c = jax.nn.softmax(beta * (dot / (k_n * m_n)), axis=1)
    w_g = g * w_c + (1.0 - g) * prev_w
    N = memory.shape[1]
    unrolled = jnp.concatenate(
        [w_g[:, N - max_shift:], w_g, w_g[:, :max_shift]], axis=1)
    w_s = sum(s[:, t:t + 1] * unrolled[:, t:t + N] for t in range(n_s))
    w_pow = w_s ** gamma
    return w_pow / (jnp.sum(w_pow, axis=1, keepdims=True) + 1e-16)


def head_seq_ref(h_seq, memory, prev_read0, prev_w0, W, bias, *, M, max_shift):
    prev_read, prev_w = prev_read0, prev_w0
    ws, rs = [], []
    for t in range(h_seq.shape[0]):
        w = head_step_ref(h_seq[t], prev_read, memory, prev_w, W, bias,
                          M=M, max_shift=max_shift)
        r = jnp.einsum("bn,bnm->bm", w, memory)
        ws.append(w)
        rs.append(r)
        prev_w, prev_read = w, r
    return jnp.stack(ws, 0), jnp.stack(rs, 0)


if __name__ == "__main__":
    B, N, M = 2, 16, 32          # batch, memory rows, memory cols (num_cols)
    H = 32                       # hidden_size
    MAX_SHIFT = 1
    T = 8                        # timesteps folded into one kernel launch

    key = jax.random.PRNGKey(0)
    ks = jax.random.split(key, 6)

    # HeadBase.__init__ shapes: nn.Linear(H + M, sum(scheme)),
    # scheme sizes [M, 1, 1, 2*max_shift+1, 1].
    D_in = H + M
    D_out = M + 1 + 1 + (2 * MAX_SHIFT + 1) + 1
    W = 0.1 * jax.random.normal(ks[0], (D_in, D_out), jnp.float32)   # (in, out)
    bias = 0.1 * jax.random.normal(ks[1], (D_out,), jnp.float32)

    memory = jax.random.normal(ks[2], (B, N, M), jnp.float32)
    h_seq = jax.random.normal(ks[3], (T, B, H), jnp.float32)
    prev_read0 = jax.random.normal(ks[4], (B, M), jnp.float32)
    prev_w0 = jax.nn.softmax(jax.random.normal(ks[5], (B, N), jnp.float32), axis=1)

    # Full T-step recurrence in one pallas_call.
    w_seq, r_seq = head_forward_seq(h_seq, memory, prev_read0, prev_w0, W, bias,
                                    M=M, max_shift=MAX_SHIFT)
    w_seq, r_seq = jax.block_until_ready((w_seq, r_seq))

    # Single-step path (per-call HeadBase.forward semantics).
    w1, r1 = head_step(h_seq[0], prev_read0, memory, prev_w0, W, bias,
                       M=M, max_shift=MAX_SHIFT)
    w1, r1 = jax.block_until_ready((w1, r1))

    w_ref, r_ref = head_seq_ref(h_seq, memory, prev_read0, prev_w0, W, bias,
                                M=M, max_shift=MAX_SHIFT)

    assert w_seq.shape == (T, B, N) and r_seq.shape == (T, B, M)
    assert bool(jnp.all(jnp.isfinite(w_seq))) and bool(jnp.all(jnp.isfinite(r_seq)))
    # Sharpened weights are a normalized distribution over memory rows.
    assert bool(jnp.all(jnp.abs(jnp.sum(w_seq, axis=2) - 1.0) < 1e-4))
    # Exact divides restored -> tight tolerance (only rsqrt/exp-log transcendentals differ).
    assert bool(jnp.max(jnp.abs(w_seq - w_ref)) < 1e-3)
    assert bool(jnp.max(jnp.abs(r_seq - r_ref)) < 5e-3)
    assert bool(jnp.max(jnp.abs(w1 - w_ref[0])) < 1e-3)
    assert bool(jnp.max(jnp.abs(r1 - r_ref[0])) < 5e-3)
    print("KERNEL_OK")
</pallas_src>

<mosaic_0001>
module attributes {stable_mosaic.version = 11 : i64} {
  func.func @_head_seq_kernel(%arg0: i32, %arg1: memref<1x2x32xf32, #tpu.memory_space<vmem>>, %arg2: memref<65x38xf32, #tpu.memory_space<vmem>>, %arg3: memref<2x16x32xf32, #tpu.memory_space<vmem>>, %arg4: memref<2x48xf32, #tpu.memory_space<vmem>>, %arg5: memref<1x2x16xf32, #tpu.memory_space<vmem>>, %arg6: memref<1x2x32xf32, #tpu.memory_space<vmem>>, %arg7: memref<2x65xf32, #tpu.memory_space<vmem>>, %arg8: memref<2x16xf32, #tpu.memory_space<vmem>>, %arg9: memref<2x16xf32, #tpu.memory_space<vmem>>) attributes {dimension_semantics = [#tpu.dimension_semantics<arbitrary>], iteration_bounds = array<i64: 8>, scalar_prefetch = 0 : i64, scratch_operands = 3 : i64, tpu.core_type = #tpu.core_type<tc>, window_params = [{transform_indices = @transform_0, window_bounds = array<i64: 1, 2, 32>}, {pipeline_mode = #tpu.pipeline_mode<synchronous>, transform_indices = @transform_1, window_bounds = array<i64: 65, 38>}, {pipeline_mode = #tpu.pipeline_mode<synchronous>, transform_indices = @transform_2, window_bounds = array<i64: 2, 16, 32>}, {pipeline_mode = #tpu.pipeline_mode<synchronous>, transform_indices = @transform_3, window_bounds = array<i64: 2, 48>}, {transform_indices = @transform_4, window_bounds = array<i64: 1, 2, 16>}, {transform_indices = @transform_5, window_bounds = array<i64: 1, 2, 32>}]} {
    %c0_i32 = arith.constant 0 : i32
    %0 = arith.cmpi eq, %arg0, %c0_i32 : i32
    %1 = arith.extui %0 : i1 to i32
    %c0_i32_0 = arith.constant 0 : i32
    %2 = arith.cmpi ne, %1, %c0_i32_0 : i32
    scf.if %2 {
      %c0_47 = arith.constant 0 : index
      %c0_48 = arith.constant 0 : index
      %129 = vector.load %arg4[%c0_47, %c0_48] : memref<2x48xf32, #tpu.memory_space<vmem>>, vector<2x32xf32>
      %c0_49 = arith.constant 0 : index
      %c32_50 = arith.constant 32 : index
      %130 = vector.load %arg7[%c0_49, %c32_50] : memref<2x65xf32, #tpu.memory_space<vmem>>, vector<2x32xf32>
      tpu.vector_store %arg7[%c0_49, %c32_50], %129 {strides = array<i32>} : memref<2x65xf32, #tpu.memory_space<vmem>>, vector<2x32xf32>,
      %cst_51 = arith.constant 1.000000e+00 : f32
      %131 = vector.broadcast %cst_51 : f32 to vector<2x1xf32>
      %c0_52 = arith.constant 0 : index
      %c64 = arith.constant 64 : index
      %132 = vector.load %arg7[%c0_52, %c64] : memref<2x65xf32, #tpu.memory_space<vmem>>, vector<2x1xf32>
      tpu.vector_store %arg7[%c0_52, %c64], %131 {strides = array<i32>} : memref<2x65xf32, #tpu.memory_space<vmem>>, vector<2x1xf32>,
      %c0_53 = arith.constant 0 : index
      %c32_54 = arith.constant 32 : index
      %133 = vector.load %arg4[%c0_53, %c32_54] : memref<2x48xf32, #tpu.memory_space<vmem>>, vector<2x16xf32>
      %c0_55 = arith.constant 0 : index
      %c0_56 = arith.constant 0 : index
      %134 = vector.load %arg8[%c0_55, %c0_56] : memref<2x16xf32, #tpu.memory_space<vmem>>, vector<2x16xf32>
      tpu.vector_store %arg8[%c0_55, %c0_56], %133 {strides = array<i32>} : memref<2x16xf32, #tpu.memory_space<vmem>>, vector<2x16xf32>,
      %c0_57 = arith.constant 0 : index
      %c0_58 = arith.constant 0 : index
      %c0_59 = arith.constant 0 : index
      %135 = vector.load %arg3[%c0_57, %c0_58, %c0_59] : memref<2x16x32xf32, #tpu.memory_space<vmem>>, vector<2x16x32xf32>
      %136 = arith.mulf %135, %135 : vector<2x16x32xf32>
      %cst_60 = arith.constant dense<0.000000e+00> : vector<2x16xf32>
      %137 = vector.multi_reduction <add>, %136, %cst_60 [2] : vector<2x16x32xf32> to vector<2x16xf32>
      %cst_61 = arith.constant 1.000000e-16 : f32
      %138 = vector.broadcast %cst_61 : f32 to vector<2x16xf32>
      %139 = arith.maximumf %137, %138 : vector<2x16xf32>
      %140 = math.rsqrt %139 : vector<2x16xf32>
      %c0_62 = arith.constant 0 : index
      %c0_63 = arith.constant 0 : index
      %141 = vector.load %arg9[%c0_62, %c0_63] : memref<2x16xf32, #tpu.memory_space<vmem>>, vector<2x16xf32>
      tpu.vector_store %arg9[%c0_62, %c0_63], %140 {strides = array<i32>} : memref<2x16xf32, #tpu.memory_space<vmem>>, vector<2x16xf32>,
    } else {
    }
    %c0 = arith.constant 0 : index
    %c0_1 = arith.constant 0 : index
    %c0_2 = arith.constant 0 : index
    %3 = vector.load %arg1[%c0, %c0_1, %c0_2] : memref<1x2x32xf32, #tpu.memory_space<vmem>>, vector<1x2x32xf32>
    %4 = vector.shape_cast %3 : vector<1x2x32xf32> to vector<2x32xf32>
    %c0_3 = arith.constant 0 : index
    %c0_4 = arith.constant 0 : index
    %5 = vector.load %arg7[%c0_3, %c0_4] : memref<2x65xf32, #tpu.memory_space<vmem>>, vector<2x32xf32>
    tpu.vector_store %arg7[%c0_3, %c0_4], %4 {strides = array<i32>} : memref<2x65xf32, #tpu.memory_space<vmem>>, vector<2x32xf32>,
    %c0_5 = arith.constant 0 : index
    %c0_6 = arith.constant 0 : index
    %6 = vector.load %arg7[%c0_5, %c0_6] : memref<2x65xf32, #tpu.memory_space<vmem>>, vector<2x65xf32>
    %c0_7 = arith.constant 0 : index
    %c0_8 = arith.constant 0 : index
    %7 = vector.load %arg2[%c0_7, %c0_8] : memref<65x38xf32, #tpu.memory_space<vmem>>, vector<65x38xf32>
    %cst = arith.constant dense<0.000000e+00> : vector<2x38xf32>
    %8 = tpu.matmul %6, %7, %cst {dimension_numbers = #tpu.dot_dimension_numbers<[1], [0], [0], [1], [0, 0, 1, 1], [], []>} : vector<2x65xf32>, vector<65x38xf32>, vector<2x38xf32> -> vector<2x38xf32>
    %9 = vector.extract_strided_slice %8 {offsets = [0, 0], sizes = [2, 32], strides = [1, 1]} : vector<2x38xf32> to vector<2x32xf32>
    %10 = math.tanh %9 : vector<2x32xf32>
    %11 = vector.extract_strided_slice %8 {offsets = [0, 32], sizes = [2, 6], strides = [1, 1]} : vector<2x38xf32> to vector<2x6xf32>
    %12 = vector.extract_strided_slice %11 {offsets = [0, 0], sizes = [2, 1], strides = [1, 1]} : vector<2x6xf32> to vector<2x1xf32>
    %cst_9 = arith.constant 0.000000e+00 : f32
    %13 = vector.broadcast %cst_9 : f32 to vector<2x1xf32>
    %14 = arith.maximumf %12, %13 : vector<2x1xf32>
    %15 = math.absf %12 : vector<2x1xf32>
    %cst_10 = arith.constant 0.000000e+00 : f32
    %16 = vector.broadcast %cst_10 : f32 to vector<2x1xf32>
    %17 = arith.subf %16, %15 : vector<2x1xf32>
    %18 = math.exp %17 : vector<2x1xf32>
    %cst_11 = arith.constant 1.000000e+00 : f32
    %19 = vector.broadcast %cst_11 : f32 to vector<2x1xf32>
    %20 = arith.addf %19, %18 : vector<2x1xf32>
    %21 = math.log %20 : vector<2x1xf32>
    %22 = arith.addf %14, %21 : vector<2x1xf32>
    %23 = vector.extract_strided_slice %11 {offsets = [0, 1], sizes = [2, 1], strides = [1, 1]} : vector<2x6xf32> to vector<2x1xf32>
    %cst_12 = arith.constant 0.000000e+00 : f32
    %24 = vector.broadcast %cst_12 : f32 to vector<2x1xf32>
    %25 = arith.subf %24, %23 : vector<2x1xf32>
    %26 = math.exp %25 : vector<2x1xf32>
    %cst_13 = arith.constant 1.000000e+00 : f32
    %27 = vector.broadcast %cst_13 : f32 to vector<2x1xf32>
    %28 = arith.addf %27, %26 : vector<2x1xf32>
    %cst_14 = arith.constant 1.000000e+00 : f32
    %29 = vector.broadcast %cst_14 : f32 to vector<2x1xf32>
    %30 = arith.divf %29, %28 : vector<2x1xf32>
    %31 = vector.extract_strided_slice %11 {offsets = [0, 2], sizes = [2, 3], strides = [1, 1]} : vector<2x6xf32> to vector<2x3xf32>
    %cst_15 = arith.constant dense<0xFF800000> : vector<2xf32>
    %32 = vector.multi_reduction <maximumf>, %31, %cst_15 [1] : vector<2x3xf32> to vector<2xf32>
    %33 = vector.shape_cast %32 : vector<2xf32> to vector<2x1xf32>
    %34 = vector.broadcast %33 : vector<2x1xf32> to vector<2x3xf32>
    %35 = arith.subf %31, %34 : vector<2x3xf32>
    %36 = math.exp %35 : vector<2x3xf32>
    %cst_16 = arith.constant dense<0.000000e+00> : vector<2xf32>
    %37 = vector.multi_reduction <add>, %36, %cst_16 [1] : vector<2x3xf32> to vector<2xf32>
    %38 = vector.shape_cast %37 : vector<2xf32> to vector<2x1xf32>
    %39 = vector.broadcast %38 : vector<2x1xf32> to vector<2x3xf32>
    %40 = arith.divf %36, %39 : vector<2x3xf32>
    %41 = vector.extract_strided_slice %11 {offsets = [0, 5], sizes = [2, 1], strides = [1, 1]} : vector<2x6xf32> to vector<2x1xf32>
    %cst_17 = arith.constant 0.000000e+00 : f32
    %42 = vector.broadcast %cst_17 : f32 to vector<2x1xf32>
    %43 = arith.maximumf %41, %42 : vector<2x1xf32>
    %44 = math.absf %41 : vector<2x1xf32>
    %cst_18 = arith.constant 0.000000e+00 : f32
    %45 = vector.broadcast %cst_18 : f32 to vector<2x1xf32>
    %46 = arith.subf %45, %44 : vector<2x1xf32>
    %47 = math.exp %46 : vector<2x1xf32>
    %cst_19 = arith.constant 1.000000e+00 : f32
    %48 = vector.broadcast %cst_19 : f32 to vector<2x1xf32>
    %49 = arith.addf %48, %47 : vector<2x1xf32>
    %50 = math.log %49 : vector<2x1xf32>
    %51 = arith.addf %43, %50 : vector<2x1xf32>
    %cst_20 = arith.constant 1.000000e+00 : f32
    %52 = vector.broadcast %cst_20 : f32 to vector<2x1xf32>
    %53 = arith.addf %52, %51 : vector<2x1xf32>
    %c0_21 = arith.constant 0 : index
    %c0_22 = arith.constant 0 : index
    %c0_23 = arith.constant 0 : index
    %54 = vector.load %arg3[%c0_21, %c0_22, %c0_23] : memref<2x16x32xf32, #tpu.memory_space<vmem>>, vector<2x16x32xf32>
    %55 = vector.shape_cast %10 : vector<2x32xf32> to vector<2x1x32xf32>
    %56 = vector.broadcast %55 : vector<2x1x32xf32> to vector<2x16x32xf32>
    %57 = arith.mulf %54, %56 : vector<2x16x32xf32>
    %cst_24 = arith.constant dense<0.000000e+00> : vector<2x16xf32>
    %58 = vector.multi_reduction <add>, %57, %cst_24 [2] : vector<2x16x32xf32> to vector<2x16xf32>
    %59 = arith.mulf %10, %10 : vector<2x32xf32>
    %cst_25 = arith.constant dense<0.000000e+00> : vector<2xf32>
    %60 = vector.multi_reduction <add>, %59, %cst_25 [1] : vector<2x32xf32> to vector<2xf32>
    %61 = vector.shape_cast %60 : vector<2xf32> to vector<2x1xf32>
    %cst_26 = arith.constant 1.000000e-16 : f32
    %62 = vector.broadcast %cst_26 : f32 to vector<2x1xf32>
    %63 = arith.maximumf %61, %62 : vector<2x1xf32>
    %64 = math.rsqrt %63 : vector<2x1xf32>
    %65 = vector.broadcast %64 : vector<2x1xf32> to vector<2x16xf32>
    %66 = arith.mulf %58, %65 : vector<2x16xf32>
    %c0_27 = arith.constant 0 : index
    %c0_28 = arith.constant 0 : index
    %67 = vector.load %arg9[%c0_27, %c0_28] : memref<2x16xf32, #tpu.memory_space<vmem>>, vector<2x16xf32>
    %68 = arith.mulf %66, %67 : vector<2x16xf32>
    %69 = vector.broadcast %22 : vector<2x1xf32> to vector<2x16xf32>
    %70 = arith.mulf %69, %68 : vector<2x16xf32>
    %cst_29 = arith.constant dense<0xFF800000> : vector<2xf32>
    %71 = vector.multi_reduction <maximumf>, %70, %cst_29 [1] : vector<2x16xf32> to vector<2xf32>
    %72 = vector.shape_cast %71 : vector<2xf32> to vector<2x1xf32>
    %73 = vector.broadcast %72 : vector<2x1xf32> to vector<2x16xf32>
    %74 = arith.subf %70, %73 : vector<2x16xf32>
    %75 = math.exp %74 : vector<2x16xf32>
    %cst_30 = arith.constant dense<0.000000e+00> : vector<2xf32>
    %76 = vector.multi_reduction <add>, %75, %cst_30 [1] : vector<2x16xf32> to vector<2xf32>
    %77 = vector.shape_cast %76 : vector<2xf32> to vector<2x1xf32>
    %78 = vector.broadcast %77 : vector<2x1xf32> to vector<2x16xf32>
    %79 = arith.divf %75, %78 : vector<2x16xf32>
    %80 = vector.broadcast %30 : vector<2x1xf32> to vector<2x16xf32>
    %81 = arith.mulf %80, %79 : vector<2x16xf32>
    %cst_31 = arith.constant 1.000000e+00 : f32
    %82 = vector.broadcast %cst_31 : f32 to vector<2x1xf32>
    %83 = arith.subf %82, %30 : vector<2x1xf32>
    %c0_32 = arith.constant 0 : index
    %c0_33 = arith.constant 0 : index
    %84 = vector.load %arg8[%c0_32, %c0_33] : memref<2x16xf32, #tpu.memory_space<vmem>>, vector<2x16xf32>
    %85 = vector.broadcast %83 : vector<2x1xf32> to vector<2x16xf32>
    %86 = arith.mulf %85, %84 : vector<2x16xf32>
    %87 = arith.addf %81, %86 : vector<2x16xf32>
    %88 = vector.extract_strided_slice %87 {offsets = [0, 15], sizes = [2, 1], strides = [1, 1]} : vector<2x16xf32> to vector<2x1xf32>
    %89 = vector.extract_strided_slice %87 {offsets = [0, 0], sizes = [2, 1], strides = [1, 1]} : vector<2x16xf32> to vector<2x1xf32>
    %90 = tpu.concatenate %88, %87, %89 in 1 : vector<2x1xf32>, vector<2x16xf32>, vector<2x1xf32> -> vector<2x18xf32>
    %91 = vector.extract_strided_slice %40 {offsets = [0, 0], sizes = [2, 1], strides = [1, 1]} : vector<2x3xf32> to vector<2x1xf32>
    %92 = vector.extract_strided_slice %90 {offsets = [0, 0], sizes = [2, 16], strides = [1, 1]} : vector<2x18xf32> to vector<2x16xf32>
    %93 = vector.broadcast %91 : vector<2x1xf32> to vector<2x16xf32>
    %94 = arith.mulf %93, %92 : vector<2x16xf32>
    %95 = vector.extract_strided_slice %40 {offsets = [0, 1], sizes = [2, 1], strides = [1, 1]} : vector<2x3xf32> to vector<2x1xf32>
    %96 = vector.extract_strided_slice %90 {offsets = [0, 1], sizes = [2, 16], strides = [1, 1]} : vector<2x18xf32> to vector<2x16xf32>
    %97 = vector.broadcast %95 : vector<2x1xf32> to vector<2x16xf32>
    %98 = arith.mulf %97, %96 : vector<2x16xf32>
    %99 = arith.addf %94, %98 : vector<2x16xf32>
    %100 = vector.extract_strided_slice %40 {offsets = [0, 2], sizes = [2, 1], strides = [1, 1]} : vector<2x3xf32> to vector<2x1xf32>
    %101 = vector.extract_strided_slice %90 {offsets = [0, 2], sizes = [2, 16], strides = [1, 1]} : vector<2x18xf32> to vector<2x16xf32>
    %102 = vector.broadcast %100 : vector<2x1xf32> to vector<2x16xf32>
    %103 = arith.mulf %102, %101 : vector<2x16xf32>
    %104 = arith.addf %99, %103 : vector<2x16xf32>
    %cst_34 = arith.constant 9.99999935E-39 : f32
    %105 = vector.broadcast %cst_34 : f32 to vector<2x16xf32>
    %106 = arith.maximumf %104, %105 : vector<2x16xf32>
    %107 = math.log %106 : vector<2x16xf32>
    %108 = vector.broadcast %53 : vector<2x1xf32> to vector<2x16xf32>
    %109 = arith.mulf %108, %107 : vector<2x16xf32>
    %110 = math.exp %109 : vector<2x16xf32>
    %cst_35 = arith.constant dense<0.000000e+00> : vector<2xf32>
    %111 = vector.multi_reduction <add>, %110, %cst_35 [1] : vector<2x16xf32> to vector<2xf32>
    %112 = vector.shape_cast %111 : vector<2xf32> to vector<2x1xf32>
    %cst_36 = arith.constant 1.000000e-16 : f32
    %113 = vector.broadcast %cst_36 : f32 to vector<2x1xf32>
    %114 = arith.addf %112, %113 : vector<2x1xf32>
    %115 = vector.broadcast %114 : vector<2x1xf32> to vector<2x16xf32>
    %116 = arith.divf %110, %115 : vector<2x16xf32>
    %117 = vector.shape_cast %116 : vector<2x16xf32> to vector<2x16x1xf32>
    %118 = vector.broadcast %117 : vector<2x16x1xf32> to vector<2x16x32xf32>
    %119 = arith.mulf %118, %54 : vector<2x16x32xf32>
    %cst_37 = arith.constant dense<0.000000e+00> : vector<2x32xf32>
    %120 = vector.multi_reduction <add>, %119, %cst_37 [1] : vector<2x16x32xf32> to vector<2x32xf32>
    %c0_38 = arith.constant 0 : index
    %c0_39 = arith.constant 0 : index
    %c0_40 = arith.constant 0 : index
    %121 = vector.load %arg5[%c0_38, %c0_39, %c0_40] : memref<1x2x16xf32, #tpu.memory_space<vmem>>, vector<1x2x16xf32>
    %122 = vector.shape_cast %121 : vector<1x2x16xf32> to vector<2x16xf32>
    %123 = vector.shape_cast %116 : vector<2x16xf32> to vector<1x2x16xf32>
    tpu.vector_store %arg5[%c0_38, %c0_39, %c0_40], %123 {strides = array<i32>} : memref<1x2x16xf32, #tpu.memory_space<vmem>>, vector<1x2x16xf32>,
    %c0_41 = arith.constant 0 : index
    %c0_42 = arith.constant 0 : index
    %c0_43 = arith.constant 0 : index
    %124 = vector.load %arg6[%c0_41, %c0_42, %c0_43] : memref<1x2x32xf32, #tpu.memory_space<vmem>>, vector<1x2x32xf32>
    %125 = vector.shape_cast %124 : vector<1x2x32xf32> to vector<2x32xf32>
    %126 = vector.shape_cast %120 : vector<2x32xf32> to vector<1x2x32xf32>
    tpu.vector_store %arg6[%c0_41, %c0_42, %c0_43], %126 {strides = array<i32>} : memref<1x2x32xf32, #tpu.memory_space<vmem>>, vector<1x2x32xf32>,
    %c0_44 = arith.constant 0 : index
    %c0_45 = arith.constant 0 : index
    %127 = vector.load %arg8[%c0_44, %c0_45] : memref<2x16xf32, #tpu.memory_space<vmem>>, vector<2x16xf32>
    tpu.vector_store %arg8[%c0_44, %c0_45], %116 {strides = array<i32>} : memref<2x16xf32, #tpu.memory_space<vmem>>, vector<2x16xf32>,
    %c0_46 = arith.constant 0 : index
    %c32 = arith.constant 32 : index
    %128 = vector.load %arg7[%c0_46, %c32] : memref<2x65xf32, #tpu.memory_space<vmem>>, vector<2x32xf32>
    tpu.vector_store %arg7[%c0_46, %c32], %120 {strides = array<i32>} : memref<2x65xf32, #tpu.memory_space<vmem>>, vector<2x32xf32>,
    return
  }
  func.func @transform_0(%arg0: i32) -> (i32, i32, i32) {
    %c0_i32 = arith.constant 0 : i32
    %c0_i32_0 = arith.constant 0 : i32
    %c0_i32_1 = arith.constant 0 : i32
    return %arg0, %c0_i32, %c0_i32_0 : i32, i32, i32
  }
  func.func @transform_1(%arg0: i32) -> (i32, i32) {
    %c0_i32 = arith.constant 0 : i32
    %c0_i32_0 = arith.constant 0 : i32
    %c0_i32_1 = arith.constant 0 : i32
    return %c0_i32, %c0_i32_0 : i32, i32
  }
  func.func @transform_2(%arg0: i32) -> (i32, i32, i32) {
    %c0_i32 = arith.constant 0 : i32
    %c0_i32_0 = arith.constant 0 : i32
    %c0_i32_1 = arith.constant 0 : i32
    %c0_i32_2 = arith.constant 0 : i32
    return %c0_i32, %c0_i32_0, %c0_i32_1 : i32, i32, i32
  }
  func.func @transform_3(%arg0: i32) -> (i32, i32) {
    %c0_i32 = arith.constant 0 : i32
    %c0_i32_0 = arith.constant 0 : i32
    %c0_i32_1 = arith.constant 0 : i32
    return %c0_i32, %c0_i32_0 : i32, i32
  }
  func.func @transform_4(%arg0: i32) -> (i32, i32, i32) {
    %c0_i32 = arith.constant 0 : i32
    %c0_i32_0 = arith.constant 0 : i32
    %c0_i32_1 = arith.constant 0 : i32
    return %arg0, %c0_i32, %c0_i32_0 : i32, i32, i32
  }
  func.func @transform_5(%arg0: i32) -> (i32, i32, i32) {
    %c0_i32 = arith.constant 0 : i32
    %c0_i32_0 = arith.constant 0 : i32
    %c0_i32_1 = arith.constant 0 : i32
    return %arg0, %c0_i32, %c0_i32_0 : i32, i32, i32
  }
}

</mosaic_0001>

<llo_original>
// kernel: head_forward_seq.1
$region0: #{head_forward_seq.1}
  #allocation0 [shape = 'u32[]', space=smem, size = 0x4, offset = 0x4, fixed_abs, tag = 'smem constant byte address 0x4 - core index']
  #allocation1 [shape = 'u32[144,128]{1,0:T(1,128)}', space=vmem, size = 0x12000, scoped, tag = 'internal scratch']
  #allocation2 [shape = 'f32[2,65]{1,0:T(2,128)}', space=vmem, size = 0x400, scoped, tag = 'scratch operand']
  #allocation3 [shape = 'f32[2,16]{1,0:T(2,128)}', space=vmem, size = 0x400, scoped, tag = 'scratch operand']
  #allocation4 [shape = 'f32[2,16]{1,0:T(2,128)}', space=vmem, size = 0x400, scoped, tag = 'scratch operand']
  %s0 = inlined_call_operand.vmem [shape: f32[8,2,32], index: 0, kind: input, shape index: {}]
  %s1 = inlined_call_operand.vmem [shape: f32[65,38], index: 1, kind: input, shape index: {}]
  %s2 = inlined_call_operand.vmem [shape: f32[2,16,32], index: 2, kind: input, shape index: {}]
  %s3 = inlined_call_operand.vmem [shape: f32[2,48], index: 3, kind: input, shape index: {}]
  %s4 = inlined_call_operand.hbm [shape: f32[8,2,16], index: 4, kind: output, shape index: {0}]
  %s5 = inlined_call_operand.hbm [shape: f32[8,2,32], index: 5, kind: output, shape index: {1}]
  %6 = xla_tuple %s4, %s5
  %s7 = sld [smem:[#allocation0]]
  $region61: #{head_forward_seq.1} parent=0
    _
  %s9 = ssub.s32 1, %s7
  %s10 = scalar_select 0, %s9, %s7
  $region1: #{head_forward_seq.1} parent=0
    #allocation5 [shape = 'u8[2048]{0}', space=vmem, size = 0x800, scoped, tag = 'output window, operand 0']
    #allocation6 [shape = 's32[2]{0}', space=sflag, size = 0x8, scoped, tag = 'scoped memory for head_forward_seq.1']
    #allocation7 [shape = 'u8[2048]{0}', space=vmem, size = 0x800, scoped, tag = 'output window, operand 1']
    #allocation8 [shape = 's32[2]{0}', space=sflag, size = 0x8, scoped, tag = 'scoped memory for head_forward_seq.1']
    %11 = vsyncpa [#allocation6], 0
    %s12 = scalar_lea.sflag [#allocation6], 1
    %13 = vsyncpa %s12, 0
    %14 = vsyncpa [#allocation8], 0
    %s15 = scalar_lea.sflag [#allocation8], 1
    %16 = vsyncpa %s15, 0
    loop: start=0, step=1, limit=10
    $region2: #{head_forward_seq.1} parent=1 // loop_pre_header
      _
    $region3: #{head_forward_seq.1} parent=1 // loop_header
      %s18 = sphi 0, %s22
      %p19 = scmp.ge.s32.totalorder %s18, 10
      %s28 = sphi 0, %s30
      %s31 = sphi 0, %s28
      %s32 = sphi 0, %s31
      %s48 = sphi 0, %s32
      %s52 = sphi 0, %s52
      %s54 = sphi 0, %s52
      %s55 = sphi 0, %s54
      %s69 = sphi 0, %s55
      %s73 = sphi 0, %s73
      %s75 = sphi 0, %s73
      %s76 = sphi 0, %s75
      %s90 = sphi 0, %s76
      %s94 = sphi 0, %s94
      %s96 = sphi 0, %s94
      %s97 = sphi 0, %s96
      %s111 = sphi 0, %s97
      %s117 = sphi 0, %s119
      %s120 = sphi 0, %s117
      %s121 = sphi 0, %s120
      %s137 = sphi 0, %s121
      %s143 = sphi 0, %s145
      %s146 = sphi 0, %s143
      %s147 = sphi 0, %s146
      %s163 = sphi 0, %s147
    $region4: #{head_forward_seq.1} parent=1 // loop_header_branch
      %21 = sbr.rel (%p19) target = $region8
    $region5: #{head_forward_seq.1} parent=1 // loop_body
      %s23 = ssub.s32 %s18, 1
      %s24 = ssub.s32 %s18, 2
      %s25 = sadd.s32 %s18, 1
      %s26 = ssub.s32 %s18, %s25
      %p27 = scmp.eq.s32.totalorder %s26, 0
      %s29 = sadd.s32 %s28, 1
      %s30 = scalar_select %p27, %s28, %s29
      %p33 = pneg %p27
      %p34 = scmp.eq.s32.totalorder %s18, 7
      %p35 = por %p33, %p34
      %p36 = scmp.ne.s32.totalorder %s28, %s31
      %p37 = scmp.eq.s32.totalorder %s18, 0
      %p38 = por %p36, %p37
      %p39 = scmp.ne.s32.totalorder %s28, %s31
      %p40 = scmp.eq.s32.totalorder %s23, 7
      %p41 = por %p39, %p40
      %p42 = scmp.ne.s32.totalorder %s31, %s32
      %p43 = scmp.eq.s32.totalorder %s23, 0
      %p44 = por %p42, %p43
      %p45 = scmp.ne.s32.totalorder %s31, %s32
      %p46 = scmp.eq.s32.totalorder %s24, 7
      %p47 = por %p45, %p46
      %p49 = scmp.ne.s32.totalorder %s32, %s48
      %p50 = scmp.eq.s32.totalorder %s24, 0
      %p51 = por %p49, %p50
      %s53 = sadd.s32 %s52, 1
      %p56 = scmp.eq.s32.totalorder %s18, 7
      %p57 = scmp.ne.s32.totalorder %s52, %s54
      %p58 = scmp.eq.s32.totalorder %s18, 0
      %p59 = por %p57, %p58
      %p60 = scmp.ne.s32.totalorder %s52, %s54
      %p61 = scmp.eq.s32.totalorder %s23, 7
      %p62 = por %p60, %p61
      %p63 = scmp.ne.s32.totalorder %s54, %s55
      %p64 = scmp.eq.s32.totalorder %s23, 0
      %p65 = por %p63, %p64
      %p66 = scmp.ne.s32.totalorder %s54, %s55
      %p67 = scmp.eq.s32.totalorder %s24, 7
      %p68 = por %p66, %p67
      %p70 = scmp.ne.s32.totalorder %s55, %s69
      %p71 = scmp.eq.s32.totalorder %s24, 0
      %p72 = por %p70, %p71
      %s74 = sadd.s32 %s73, 1
      %p77 = scmp.eq.s32.totalorder %s18, 7
      %p78 = scmp.ne.s32.totalorder %s73, %s75
      %p79 = scmp.eq.s32.totalorder %s18, 0
      %p80 = por %p78, %p79
      %p81 = scmp.ne.s32.totalorder %s73, %s75
      %p82 = scmp.eq.s32.totalorder %s23, 7
      %p83 = por %p81, %p82
      %p84 = scmp.ne.s32.totalorder %s75, %s76
      %p85 = scmp.eq.s32.totalorder %s23, 0
      %p86 = por %p84, %p85
      %p87 = scmp.ne.s32.totalorder %s75, %s76
      %p88 = scmp.eq.s32.totalorder %s24, 7
      %p89 = por %p87, %p88
      %p91 = scmp.ne.s32.totalorder %s76, %s90
      %p92 = scmp.eq.s32.totalorder %s24, 0
      %p93 = por %p91, %p92
      %s95 = sadd.s32 %s94, 1
      %p98 = scmp.eq.s32.totalorder %s18, 7
      %p99 = scmp.ne.s32.totalorder %s94, %s96
      %p100 = scmp.eq.s32.totalorder %s18, 0
      %p101 = por %p99, %p100
      %p102 = scmp.ne.s32.totalorder %s94, %s96
      %p103 = scmp.eq.s32.totalorder %s23, 7
      %p104 = por %p102, %p103
      %p105 = scmp.ne.s32.totalorder %s96, %s97
      %p106 = scmp.eq.s32.totalorder %s23, 0
      %p107 = por %p105, %p106
      %p108 = scmp.ne.s32.totalorder %s96, %s97
      %p109 = scmp.eq.s32.totalorder %s24, 7
      %p110 = por %p108, %p109
      %p112 = scmp.ne.s32.totalorder %s97, %s111
      %p113 = scmp.eq.s32.totalorder %s24, 0
      %p114 = por %p112, %p113
      %s115 = ssub.s32 %s18, %s25
      %p116 = scmp.eq.s32.totalorder %s115, 0
      %s118 = sadd.s32 %s117, 1
      %s119 = scalar_select %p116, %s117, %s118
      %p122 = pneg %p116
      %p123 = scmp.eq.s32.totalorder %s18, 7
      %p124 = por %p122, %p123
      %p125 = scmp.ne.s32.totalorder %s117, %s120
      %p126 = scmp.eq.s32.totalorder %s18, 0
      %p127 = por %p125, %p126
      %p128 = scmp.ne.s32.totalorder %s117, %s120
      %p129 = scmp.eq.s32.totalorder %s23, 7
      %p130 = por %p128, %p129
      %p131 = scmp.ne.s32.totalorder %s120, %s121
      %p132 = scmp.eq.s32.totalorder %s23, 0
      %p133 = por %p131, %p132
      %p134 = scmp.ne.s32.totalorder %s120, %s121
      %p135 = scmp.eq.s32.totalorder %s24, 7
      %p136 = por %p134, %p135
      %p138 = scmp.ne.s32.totalorder %s121, %s137
      %p139 = scmp.eq.s32.totalorder %s24, 0
      %p140 = por %p138, %p139
      %s141 = ssub.s32 %s18, %s25
      %p142 = scmp.eq.s32.totalorder %s141, 0
      %s144 = sadd.s32 %s143, 1
      %s145 = scalar_select %p142, %s143, %s144
      %p148 = pneg %p142
      %p149 = scmp.eq.s32.totalorder %s18, 7
      %p150 = por %p148, %p149
      %p151 = scmp.ne.s32.totalorder %s143, %s146
      %p152 = scmp.eq.s32.totalorder %s18, 0
      %p153 = por %p151, %p152
      %p154 = scmp.ne.s32.totalorder %s143, %s146
      %p155 = scmp.eq.s32.totalorder %s23, 7
      %p156 = por %p154, %p155
      %p157 = scmp.ne.s32.totalorder %s146, %s147
      %p158 = scmp.eq.s32.totalorder %s23, 0
      %p159 = por %p157, %p158
      %p160 = scmp.ne.s32.totalorder %s146, %s147
      %p161 = scmp.eq.s32.totalorder %s24, 7
      %p162 = por %p160, %p161
      %p164 = scmp.ne.s32.totalorder %s147, %s163
      %p165 = scmp.eq.s32.totalorder %s24, 0
      %p166 = por %p164, %p165
      %p167 = scmp.le.s32.totalorder 1, %s18
      %p168 = scmp.lt.s32.totalorder %s18, 9
      %p169 = pnand %p167, %p168
      %p170 = pneg %p169
      // Predicated region
      $region9: #{head_forward_seq.1} parent=5 // pred_check
        _
      $region10: #{head_forward_seq.1} parent=5 // pred_check_branch
        %172 = sbr.rel (%p169) target = $region12
      $region11: #{head_forward_seq.1} parent=5 // pred_region
        %s173 = ssub.s32 %s18, 1
        // Predicated region
        $region13: #{head_forward_seq.1} parent=11 // pred_check
          %p174 = pneg %p65
        $region14: #{head_forward_seq.1} parent=11 // pred_check_branch
          %176 = sbr.rel (%p174) target = $region16
        $region15: #{head_forward_seq.1} parent=11 // pred_region
          _
        $region16: #{head_forward_seq.1} parent=11 // pred_fallthru
          _
        // Predicated region
        $region17: #{head_forward_seq.1} parent=11 // pred_check
          %p177 = pneg %p86
        $region18: #{head_forward_seq.1} parent=11 // pred_check_branch
          %179 = sbr.rel (%p177) target = $region20
        $region19: #{head_forward_seq.1} parent=11 // pred_region
          _
        $region20: #{head_forward_seq.1} parent=11 // pred_fallthru
          _
        // Predicated region
        $region21: #{head_forward_seq.1} parent=11 // pred_check
          %p180 = pneg %p107
        $region22: #{head_forward_seq.1} parent=11 // pred_check_branch
          %182 = sbr.rel (%p180) target = $region24
        $region23: #{head_forward_seq.1} parent=11 // pred_region
          _
        $region24: #{head_forward_seq.1} parent=11 // pred_fallthru
          _
      $region12: #{head_forward_seq.1} parent=5 // pred_fallthru
        _
      %p183 = scmp.lt.s32.totalorder %s18, 8
      // Predicated region
      $region25: #{head_forward_seq.1} parent=5 // pred_check
        %p184 = pneg %p183
      $region26: #{head_forward_seq.1} parent=5 // pred_check_branch
        %186 = sbr.rel (%p184) target = $region28
      $region27: #{head_forward_seq.1} parent=5 // pred_region
        // Predicated region
        $region29: #{head_forward_seq.1} parent=27 // pred_check
          %p187 = pneg %p38
        $region30: #{head_forward_seq.1} parent=27 // pred_check_branch
          %189 = sbr.rel (%p187) target = $region32
        $region31: #{head_forward_seq.1} parent=27 // pred_region
          %p190 = scmp.lt.s32.totalorder %s18, 7
          %s191 = scalar_select %p190, %s18, 7
          %s192 = smul.addr %s191, 2
          %s193 = scalar_lea.vmem %s0, %s192
        $region32: #{head_forward_seq.1} parent=27 // pred_fallthru
          _
      $region28: #{head_forward_seq.1} parent=5 // pred_fallthru
        _
      %p194 = scmp.le.s32.totalorder 1, %s18
      %p195 = scmp.lt.s32.totalorder %s18, 9
      %p196 = pnand %p194, %p195
      %p197 = pneg %p196
      // Predicated region
      $region33: #{head_forward_seq.1} parent=5 // pred_check
        _
      $region34: #{head_forward_seq.1} parent=5 // pred_check_branch
        %199 = sbr.rel (%p196) target = $region36
      $region35: #{head_forward_seq.1} parent=5 // pred_region
        %s200 = ssub.s32 %s18, 1
        %p201 = scmp.lt.s32.totalorder %s23, 7
        %s202 = scalar_select %p201, %s23, 7
        %s203 = smul.addr %s202, 2
        %s204 = scalar_lea.vmem %s0, %s203
        %p205 = pneg %p44
        %p206 = pneg %p41
        %p207 = pneg %p65
        %p208 = pneg %p62
        %p209 = pneg %p86
        %p210 = pneg %p83
        %p211 = pneg %p107
        %p212 = pneg %p104
        %p213 = pneg %p133
        %p214 = pneg %p130
        %s215 = sand.u32 %s120, 1
        %s216 = scalar_lea.sflag [#allocation6], %s215
        %s217 = sand.u32 %s120, 1
        %s218 = smul.addr %s217, 2
        %s219 = scalar_lea.vmem [#allocation5], %s218
        %p220 = pneg %p159
        %p221 = pneg %p156
        %s222 = sand.u32 %s146, 1
        %s223 = scalar_lea.sflag [#allocation8], %s222
        %s224 = sand.u32 %s146, 1
        %s225 = smul.addr %s224, 2
        %s226 = scalar_lea.vmem [#allocation7], %s225
        %p227 = scmp.lt.s32.totalorder %s23, 7
        %s228 = scalar_select %p227, %s23, 7
        %s229 = smul.addr %s228, 2
        %s230 = scalar_lea.vmem %s0, %s229
        %p231 = scmp.eq.s32.totalorder %s23, 0
        // Predicated region
        $region37: #{head_forward_seq.1} parent=35 // pred_check
          %p232 = pneg %p231
        $region38: #{head_forward_seq.1} parent=35 // pred_check_branch
          %234 = sbr.rel (%p232) target = $region40
        $region39: #{head_forward_seq.1} parent=35 // pred_region
          %v235 = vld [vmem:[%s3] sm:$0x3]
          %237 = vrot.lane.b32.xlu0 %v235, 32
          %v238 = vpop.permute.xlu0 %237
          %vm240 = vcmask 517376
          %241 = vst.msk [vmem:[#allocation2] sm:$0x3] %vm240, %v238
          %vm242 = vcmask 525824
          %243 = vst.msk [vmem:[#allocation2] sm:$0x3] %vm242, 1.0
          %v244 = vld [vmem:[%s3] sm:$0x3]
          %246 = vrot.lane.b32.xlu0 %v244, 96
          %v247 = vpop.permute.xlu0 %246
          %vm249 = vcmask 123904
          %250 = vst.msk [vmem:[#allocation3] sm:$0x3] %vm249, %v247
          %v251 = vld [vmem:[%s2] sm:$0xff]
          %v252 = vld [vmem:[%s2 + $0x8] sm:$0xff]
          %v253 = vld [vmem:[%s2 + $0x10] sm:$0xff]
          %v254 = vld [vmem:[%s2 + $0x18] sm:$0xff]
          %v255 = vmul.f32 %v251, %v251
          %v256 = vmul.f32 %v252, %v252
          %v257 = vmul.f32 %v253, %v253
          %v258 = vmul.f32 %v254, %v254
          %vm259 = vcmask 261120
          %v260 = vsel %vm259, %v255, 0.0
          %261 = vadd.xlane.f32.xlu0 %v260
          %v262 = vpop.xlane.xlu0 %261
          %v263 = vsel %vm259, %v256, 0.0
          %264 = vadd.xlane.f32.xlu0 %v263
          %v265 = vpop.xlane.xlu0 %264
          %v266 = vsel %vm259, %v257, 0.0
          %267 = vadd.xlane.f32.xlu0 %v266
          %v268 = vpop.xlane.xlu0 %267
          %v269 = vsel %vm259, %v258, 0.0
          %270 = vadd.xlane.f32.xlu0 %v269
          %v271 = vpop.xlane.xlu0 %270
          %v272 = vmax.f32 %v262, 1e-16
          %v273 = vmax.f32 %v265, 1e-16
          %v274 = vmax.f32 %v268, 1e-16
          %v275 = vmax.f32 %v271, 1e-16
          %v276 = vrsqrt.pop %v272
          %v277 = vrsqrt.pop %v273
          %v278 = vrsqrt.pop %v274
          %v279 = vrsqrt.pop %v275
          %v284 = vlaneseq
          %v285 = vand.u32 %v284, 127
          %v286 = vlaneseq
          %v287 = vshrl.u32 %v286, 7
          %v288 = vsub.s32 %v285, %v287
          %v289 = vrot.slane %v276, %v288
          %v290 = vadd.s32 %v285, 4294967288
          %v291 = vlaneseq
          %v292 = vshrl.u32 %v291, 7
          %v293 = vsub.s32 %v290, %v292
          %v294 = vrot.slane %v277, %v293
          %vm295 = vcmask 130112
          %v296 = vsel %vm295, %v294, %v289
          %v297 = vlaneseq
          %v298 = vshrl.u32 %v297, 7
          %v299 = vsub.s32 %v285, %v298
          %v300 = vrot.slane %v278, %v299
          %v301 = vlaneseq
          %v302 = vshrl.u32 %v301, 7
          %v303 = vsub.s32 %v290, %v302
          %v304 = vrot.slane %v279, %v303
          %v305 = vsel %vm295, %v304, %v300
          %vm306 = vcmask 1041409
          %v307 = vsel %vm306, %v305, %v296
          %309 = vst.msk [vmem:[#allocation4] sm:$0x3] %vm249, %v307
        $region40: #{head_forward_seq.1} parent=35 // pred_fallthru
          _
        %v310 = vld [vmem:[%s230] sm:$0x3]
        %vm311 = vcmask 254976
        %312 = vst.msk [vmem:[#allocation2] sm:$0x3] %vm311, %v310
        %v313 = vld [vmem:[#allocation2] sm:$0x3]
        %v314 = vld [vmem:[%s1] sm:$0xff]
        %v315 = vld [vmem:[%s1 + $0x8] sm:$0xff]
        %v316 = vld [vmem:[%s1 + $0x10] sm:$0xff]
        %v317 = vld [vmem:[%s1 + $0x18] sm:$0xff]
        %v318 = vld [vmem:[%s1 + $0x20] sm:$0xff]
        %v319 = vld [vmem:[%s1 + $0x28] sm:$0xff]
        %v320 = vld [vmem:[%s1 + $0x30] sm:$0xff]
        %v321 = vld [vmem:[%s1 + $0x38] sm:$0xff]
        %v322 = vld [vmem:[%s1 + $0x40] sm:$0x1]
        %vm323 = vcmask 531456
        %v325 = vsel %vm323, %v313, 0
        %vm327 = vcmask 1040384
        %v329 = vsel %vm327, %v322, 0
        %331 = vmatprep.subr.mxu0 0.0
        %332 = vmatpush1.msra.mxu0 0.0
        %333 = vmatprep.subr.mxu0 0.0
        %334 = vmatpush1.msra.mxu0 0.0
        %335 = vmatprep.subr.mxu0 0.0
        %336 = vmatpush1.msra.mxu0 0.0
        %337 = vmatprep.subr.mxu0 0.0
        %338 = vmatpush1.msra.mxu0 0.0
        %339 = vmatprep.subr.mxu0 0.0
        %340 = vmatpush1.msra.mxu0 0.0
        %341 = vmatprep.subr.mxu0 0.0
        %342 = vmatpush1.msra.mxu0 0.0
        %343 = vmatprep.subr.mxu0 0.0
        %344 = vmatpush1.msra.mxu0 0.0
        %345 = vmatprep.subr.mxu0 0.0
        %346 = vmatpush1.msra.mxu0 %v329
        %347 = vmatprep.subr.mxu0 0.0
        %348 = vmatpush1.msra.mxu0 %v321
        %349 = vmatprep.subr.mxu0 0.0
        %350 = vmatpush1.msra.mxu0 %v320
        %351 = vmatprep.subr.mxu0 0.0
        %352 = vmatpush1.msra.mxu0 %v319
        %353 = vmatprep.subr.mxu0 0.0
        %354 = vmatpush1.msra.mxu0 %v318
        %355 = vmatprep.subr.mxu0 0.0
        %356 = vmatpush1.msra.mxu0 %v317
        %357 = vmatprep.subr.mxu0 0.0
        %358 = vmatpush1.msra.mxu0 %v316
        %359 = vmatprep.subr.mxu0 0.0
        %360 = vmatpush1.msra.mxu0 %v315
        %361 = vmatprep.subr.mxu0 0.0
        %362 = vmatpush1.msra.mxu0 %v314
        %363 = vmatprep.subr.mxu0 0.0
        %364 = vmatpush2.msra.mxu0 0.0
        %365 = vmatprep.subr.mxu0 0.0
        %366 = vmatpush2.msra.mxu0 0.0
        %367 = vmatprep.subr.mxu0 0.0
        %368 = vmatpush2.msra.mxu0 0.0
        %369 = vmatprep.subr.mxu0 0.0
        %370 = vmatpush2.msra.mxu0 0.0
        %371 = vmatprep.subr.mxu0 0.0
        %372 = vmatpush2.msra.mxu0 0.0
        %373 = vmatprep.subr.mxu0 0.0
        %374 = vmatpush2.msra.mxu0 0.0
        %375 = vmatprep.subr.mxu0 0.0
        %376 = vmatpush2.msra.mxu0 0.0
        %377 = vmatprep.subr.mxu0 0.0
        %378 = vmatpush2.msra.mxu0 0.0
        %379 = vmatprep.subr.mxu0 0.0
        %380 = vmatpush2.msra.mxu0 0.0
        %381 = vmatprep.subr.mxu0 0.0
        %382 = vmatpush2.msra.mxu0 0.0
        %383 = vmatprep.subr.mxu0 0.0
        %384 = vmatpush2.msra.mxu0 0.0
        %385 = vmatprep.subr.mxu0 0.0
        %386 = vmatpush2.msra.mxu0 0.0
        %387 = vmatprep.subr.mxu0 0.0
        %388 = vmatpush2.msra.mxu0 0.0
        %389 = vmatprep.subr.mxu0 0.0
        %390 = vmatpush2.msra.mxu0 0.0
        %391 = vmatprep.subr.mxu0 0.0
        %392 = vmatpush2.msra.mxu0 0.0
        %393 = vmatprep.subr.mxu0 0.0
        %394 = vmatpush2.msra.mxu0 0.0
        %395 = vmatprep.mubr.f32.mxu0 0.0
        %396 = vmatmul.mubr.f32.gmra.mxu0 %v325
        %v397 = vpop.f32.mrf.mxu0
        %v398 = vadd.f32 0.0, %v397
        %v399 = vpop.f32.mrf.mxu0
        %400 = vdwg.mxu0
        %v401 = vtanh.pop %v398
        %v402 = vmax.f32 %v398, 0.0
        %v403 = vand.u32 2147483647, %v398
        %v404 = vsub.f32 0.0, %v403
        %v405 = vmul.f32 %v404, 1.442695
        %v406 = vpow.pop %v405
        %v407 = vadd.f32 %v406, 1.0
        %v408 = vlog2.pop %v407
        %v409 = vmul.f32 %v408, 0.6931472
        %v410 = vadd.f32 %v402, %v409
        %v411 = vsub.f32 0.0, %v398
        %v412 = vmul.f32 %v411, 1.442695
        %v413 = vpow.pop %v412
        %v414 = vadd.f32 %v413, 1.0
        %v415 = vrcp.pop %v414
        %v416 = vmul.f32 1.0, %v415
        %vm417 = vcmask 296208
        %v418 = vsel %vm417, %v398, -inf
        %419 = vmax.xlane.f32.xlu0 %v418
        %v420 = vpop.xlane.xlu0 %419
        %v421 = vsub.f32 %v398, %v420
        %v422 = vmul.f32 %v421, 1.442695
        %v423 = vpow.pop %v422
        %425 = vrot.lane.b32.xlu0 %v423, 94
        %v426 = vpop.permute.xlu0 %425
        %vm428 = vcmask 17408
        %v429 = vsel %vm428, %v426, 0.0
        %430 = vadd.xlane.f32.xlu0 %v429
        %v431 = vpop.xlane.xlu0 %430
        %v432 = vrcp.pop %v431
        %v433 = vmul.f32 %v423, %v432
        %v434 = vadd.f32 %v410, 1.0
        %v435 = vld [vmem:[%s2] sm:$0xff]
        %v436 = vld [vmem:[%s2 + $0x8] sm:$0xff]
        %v437 = vld [vmem:[%s2 + $0x10] sm:$0xff]
        %v438 = vld [vmem:[%s2 + $0x18] sm:$0xff]
        %v441 = vunpack.c.l.s4 1966171168
        %v442 = vunpack.c.0.s8 %v441
        %v443 = vlaneseq
        %v444 = vshrl.u32 %v443, 7
        %v445 = vsub.s32 %v442, %v444
        %v446 = vrot.slane %v401, %v445
        %v447 = vcombine.high %v446, %v446
        %v449 = vunpack.c.l.s4 1966171168
        %v450 = vunpack.c.0.s8 %v449
        %v451 = vlaneseq
        %v452 = vshrl.u32 %v451, 7
        %v453 = vsub.s32 %v450, %v452
        %v454 = vrot.slane %v446, %v453
        %v456 = vunpack.c.l.s4 1966171168
        %v457 = vunpack.c.0.s8 %v456
        %v458 = vlaneseq
        %v459 = vshrl.u32 %v458, 7
        %v460 = vsub.s32 %v457, %v459
        %v461 = vrot.slane %v447, %v460
        %v462 = vlaneseq
        %v463 = vshrl.u32 %v462, 7
        %v464 = vsub.s32 0, %v463
        %v465 = vrot.slane %v454, %v464
        %v466 = vlaneseq
        %v467 = vshrl.u32 %v466, 7
        %v468 = vsub.s32 0, %v467
        %v469 = vrot.slane %v461, %v468
        %v472 = vmul.f32 %v435, %v465
        %v473 = vmul.f32 %v436, %v465
        %v474 = vmul.f32 %v437, %v469
        %v475 = vmul.f32 %v438, %v469
        %vm476 = vcmask 261120
        %v477 = vsel %vm476, %v472, 0.0
        %478 = vadd.xlane.f32.xlu0 %v477
        %v479 = vpop.xlane.xlu0 %478
        %v480 = vsel %vm476, %v473, 0.0
        %481 = vadd.xlane.f32.xlu0 %v480
        %v482 = vpop.xlane.xlu0 %481
        %v483 = vsel %vm476, %v474, 0.0
        %484 = vadd.xlane.f32.xlu0 %v483
        %v485 = vpop.xlane.xlu0 %484
        %v486 = vsel %vm476, %v475, 0.0
        %487 = vadd.xlane.f32.xlu0 %v486
        %v488 = vpop.xlane.xlu0 %487
        %v489 = vmul.f32 %v401, %v401
        %v490 = vsel %vm311, %v489, 0.0
        %491 = vadd.xlane.f32.xlu0 %v490
        %v492 = vpop.xlane.xlu0 %491
        %v493 = vmax.f32 %v492, 1e-16
        %v494 = vrsqrt.pop %v493
        %v496 = vlaneseq
        %v497 = vshrl.u32 %v496, 7
        %v498 = vsub.s32 0, %v497
        %v499 = vrot.slane %v494, %v498
        %v500 = vlaneseq
        %v501 = vshrl.u32 %v500, 7
        %v502 = vsub.s32 1, %v501
        %v503 = vrot.slane %v494, %v502
        %v506 = vmul.f32 %v479, %v499
        %v507 = vmul.f32 %v482, %v499
        %v508 = vmul.f32 %v485, %v503
        %v509 = vmul.f32 %v488, %v503
        %v510 = vld [vmem:[#allocation4] sm:$0x3]
        %v512 = vlaneseq
        %v513 = vshrl.u32 %v512, 7
        %v514 = vsub.s32 0, %v513
        %v515 = vrot.slane %v510, %v514
        %517 = vbcast.lane.b32.xlu0 %v515, 256
        %v518 = vpop.permute.xlu0 %517
        %s520 = sor.u32 256, 8
        %521 = vbcast.lane.b32.xlu0 %v515, %s520
        %v522 = vpop.permute.xlu0 %521
        %v523 = vlaneseq
        %v524 = vshrl.u32 %v523, 7
        %v525 = vsub.s32 1, %v524
        %v526 = vrot.slane %v510, %v525
        %528 = vbcast.lane.b32.xlu0 %v526, 256
        %v529 = vpop.permute.xlu0 %528
        %s531 = sor.u32 256, 8
        %532 = vbcast.lane.b32.xlu0 %v526, %s531
        %v533 = vpop.permute.xlu0 %532
        %v538 = vmul.f32 %v506, %v518
        %v539 = vmul.f32 %v507, %v522
        %v540 = vmul.f32 %v508, %v529
        %v541 = vmul.f32 %v509, %v533
        %543 = vset.pattern.permute.xlu0 32
        %544 = vperm.xlu0 %543, %v410
        %v545 = vpop.permute.xlu0 %544
        %551 = vset.pattern.permute.xlu0 0
        %552 = vperm.xlu0 %551, %v538
        %v553 = vpop.permute.xlu0 %552
        %554 = vset.pattern.permute.xlu0 0
        %555 = vperm.xlu0 %554, %v539
        %v556 = vpop.permute.xlu0 %555
        %557 = vset.pattern.permute.xlu0 0
        %558 = vperm.xlu0 %557, %v540
        %v559 = vpop.permute.xlu0 %558
        %560 = vset.pattern.permute.xlu0 0
        %561 = vperm.xlu0 %560, %v541
        %v562 = vpop.permute.xlu0 %561
        %v563 = vlaneseq
        %v564 = vand.u32 %v563, 127
        %v565 = vlaneseq
        %v566 = vshrl.u32 %v565, 7
        %v567 = vsub.s32 %v564, %v566
        %v568 = vrot.slane %v553, %v567
        %v569 = vadd.s32 %v564, 4294967288
        %v570 = vlaneseq
        %v571 = vshrl.u32 %v570, 7
        %v572 = vsub.s32 %v569, %v571
        %v573 = vrot.slane %v556, %v572
        %vm574 = vcmask 130112
        %v575 = vsel %vm574, %v573, %v568
        %v576 = vlaneseq
        %v577 = vshrl.u32 %v576, 7
        %v578 = vsub.s32 %v564, %v577
        %v579 = vrot.slane %v559, %v578
        %v580 = vlaneseq
        %v581 = vshrl.u32 %v580, 7
        %v582 = vsub.s32 %v569, %v581
        %v583 = vrot.slane %v562, %v582
        %v584 = vsel %vm574, %v583, %v579
        %vm585 = vcmask 1041409
        %v586 = vsel %vm585, %v584, %v575
        %v588 = vmul.f32 %v545, %v586
        %vm589 = vcmask 123904
        %v590 = vsel %vm589, %v588, -inf
        %591 = vmax.xlane.f32.xlu0 %v590
        %v592 = vpop.xlane.xlu0 %591
        %v593 = vsub.f32 %v588, %v592
        %v594 = vmul.f32 %v593, 1.442695
        %v595 = vpow.pop %v594
        %v596 = vsel %vm589, %v595, 0.0
        %597 = vadd.xlane.f32.xlu0 %v596
        %v598 = vpop.xlane.xlu0 %597
        %v599 = vrcp.pop %v598
        %v600 = vmul.f32 %v595, %v599
        %602 = vset.pattern.permute.xlu0 33
        %603 = vperm.xlu0 %602, %v416
        %v604 = vpop.permute.xlu0 %603
        %v606 = vmul.f32 %v604, %v600
        %v607 = vsub.f32 1.0, %v416
        %v608 = vld [vmem:[#allocation3] sm:$0x3]
        %610 = vset.pattern.permute.xlu0 33
        %611 = vperm.xlu0 %610, %v607
        %v612 = vpop.permute.xlu0 %611
        %v614 = vmul.f32 %v612, %v608
        %v615 = vadd.f32 %v606, %v614
        %617 = vrot.lane.b32.xlu0 %v615, 113
        %v618 = vpop.permute.xlu0 %617
        %620 = vrot.lane.b32.xlu0 %v615, 1
        %v621 = vpop.permute.xlu0 %620
        %623 = vrot.lane.b32.xlu0 %v615, 17
        %v624 = vpop.permute.xlu0 %623
        %vm626 = vcmask 7168
        %v627 = vsel %vm626, %v618, %v621
        %vm628 = vcmask 138240
        %v629 = vsel %vm628, %v627, %v624
        %631 = vset.pattern.permute.xlu0 34
        %632 = vperm.xlu0 %631, %v433
        %v633 = vpop.permute.xlu0 %632
        %v635 = vmul.f32 %v633, %v629
        %636 = vset.pattern.permute.xlu0 35
        %637 = vperm.xlu0 %636, %v433
        %v638 = vpop.permute.xlu0 %637
        %v640 = vmul.f32 %v638, %v629
        %642 = vrot.lane.b32.xlu0 %v640, 127
        %v643 = vpop.permute.xlu0 %642
        %v645 = vadd.f32 %v635, %v643
        %646 = vset.pattern.permute.xlu0 36
        %647 = vperm.xlu0 %646, %v433
        %v648 = vpop.permute.xlu0 %647
        %v650 = vmul.f32 %v648, %v629
        %652 = vrot.lane.b32.xlu0 %v650, 126
        %v653 = vpop.permute.xlu0 %652
        %v655 = vadd.f32 %v645, %v653
        %v656 = vmax.f32 %v655, 1e-38
        %v657 = vlog2.pop %v656
        %v658 = vmul.f32 %v657, 0.6931472
        %660 = vset.pattern.permute.xlu0 37
        %661 = vperm.xlu0 %660, %v434
        %v662 = vpop.permute.xlu0 %661
        %v664 = vmul.f32 %v662, %v658
        %v665 = vmul.f32 %v664, 1.442695
        %v666 = vpow.pop %v665
        %v667 = vsel %vm589, %v666, 0.0
        %668 = vadd.xlane.f32.xlu0 %v667
        %v669 = vpop.xlane.xlu0 %668
        %v670 = vadd.f32 %v669, 1e-16
        %v671 = vrcp.pop %v670
        %v672 = vmul.f32 %v666, %v671
        %v673 = vlaneseq
        %v674 = vshrl.u32 %v673, 7
        %v675 = vsub.s32 0, %v674
        %v676 = vrot.slane %v672, %v675
        %678 = vbcast.lane.b32.xlu0 %v676, 256
        %v679 = vpop.permute.xlu0 %678
        %s681 = sor.u32 256, 8
        %682 = vbcast.lane.b32.xlu0 %v676, %s681
        %v683 = vpop.permute.xlu0 %682
        %v684 = vlaneseq
        %v685 = vshrl.u32 %v684, 7
        %v686 = vsub.s32 1, %v685
        %v687 = vrot.slane %v672, %v686
        %689 = vbcast.lane.b32.xlu0 %v687, 256
        %v690 = vpop.permute.xlu0 %689
        %s692 = sor.u32 256, 8
        %693 = vbcast.lane.b32.xlu0 %v687, %s692
        %v694 = vpop.permute.xlu0 %693
        %v695 = vmul.f32 %v679, %v435
        %v696 = vmul.f32 %v683, %v436
        %v697 = vmul.f32 %v690, %v437
        %v698 = vmul.f32 %v694, %v438
        %v699 = vsel %vm476, %v695, 0.0
        %v700 = vsel %vm476, %v696, 0.0
        %v701 = vadd.f32 %v699, %v700
        %v702 = vrot.slane %v701, 4
        %v703 = vadd.f32 %v701, %v702
        %v704 = vrot.slane %v703, 2
        %v705 = vadd.f32 %v703, %v704
        %v706 = vrot.slane %v705, 1
        %v707 = vadd.f32 %v705, %v706
        %v708 = vsel %vm476, %v697, 0.0
        %v709 = vsel %vm476, %v698, 0.0
        %v710 = vadd.f32 %v708, %v709
        %v711 = vrot.slane %v710, 4
        %v712 = vadd.f32 %v710, %v711
        %v713 = vrot.slane %v712, 2
        %v714 = vadd.f32 %v712, %v713
        %v715 = vrot.slane %v714, 1
        %v716 = vadd.f32 %v714, %v715
        %717 = vst.msk [vmem:[%s219] sm:$0x3] %vm589, %v672
        %v720 = vsel %vm585, %v716, %v707
        %722 = vst.msk [vmem:[%s226] sm:$0x3] %vm311, %v720
        %723 = vst.msk [vmem:[#allocation3] sm:$0x3] %vm589, %v672
        %724 = vrot.lane.b32.xlu0 %v720, 32
        %v725 = vpop.permute.xlu0 %724
        %vm727 = vcmask 517376
        %728 = vst.msk [vmem:[#allocation2] sm:$0x3] %vm727, %v725
        %s729 = sand.u32 %s120, 1
        %s730 = scalar_lea.sflag [#allocation6], %s729
        %s731 = sand.u32 %s120, 1
        %s732 = smul.addr %s731, 2
        %s733 = scalar_lea.vmem [#allocation5], %s732
        %s734 = sand.u32 %s146, 1
        %s735 = scalar_lea.sflag [#allocation8], %s734
        %s736 = sand.u32 %s146, 1
        %s737 = smul.addr %s736, 2
        %s738 = scalar_lea.vmem [#allocation7], %s737
        // Predicated region
        $region41: #{head_forward_seq.1} parent=35 // pred_check
          %p739 = pneg %p130
        $region42: #{head_forward_seq.1} parent=35 // pred_check_branch
          %741 = sbr.rel (%p739) target = $region44
        $region43: #{head_forward_seq.1} parent=35 // pred_region
          %s743 = ssub.s32 32, 32
          %744 = vsyncadd %s730, %s743
          %s745 = smul.addr %s23, 32
          %s746 = scalar_lea.hbm %s4, %s745
          %s748 = sshll.u32 %s733, 4
          %s749 = int_to_ptr.vmem [resolvable:$true] %s748
          %751 = dma.vmem_to_hbm [thread:$0]  %s749, 32, %s746, %s730
        $region44: #{head_forward_seq.1} parent=35 // pred_fallthru
          _
        // Predicated region
        $region45: #{head_forward_seq.1} parent=35 // pred_check
          %p752 = pneg %p156
        $region46: #{head_forward_seq.1} parent=35 // pred_check_branch
          %754 = sbr.rel (%p752) target = $region48
        $region47: #{head_forward_seq.1} parent=35 // pred_region
          %s756 = ssub.s32 32, 32
          %757 = vsyncadd %s735, %s756
          %s758 = smul.addr %s23, 32
          %s759 = scalar_lea.hbm %s5, %s758
          %s761 = sshll.u32 %s738, 4
          %s762 = int_to_ptr.vmem [resolvable:$true] %s761
          %764 = dma.vmem_to_hbm [thread:$0]  %s762, 32, %s759, %s735
        $region48: #{head_forward_seq.1} parent=35 // pred_fallthru
          _
      $region36: #{head_forward_seq.1} parent=5 // pred_fallthru
        _
      %p765 = scmp.le.s32.totalorder 2, %s18
      // Predicated region
      $region49: #{head_forward_seq.1} parent=5 // pred_check
        %p766 = pneg %p765
      $region50: #{head_forward_seq.1} parent=5 // pred_check_branch
        %768 = sbr.rel (%p766) target = $region52
      $region51: #{head_forward_seq.1} parent=5 // pred_region
        %s769 = ssub.s32 %s18, 2
        // Predicated region
        $region53: #{head_forward_seq.1} parent=51 // pred_check
          %p770 = pneg %p136
        $region54: #{head_forward_seq.1} parent=51 // pred_check_branch
          %772 = sbr.rel (%p770) target = $region56
        $region55: #{head_forward_seq.1} parent=51 // pred_region
          %s773 = sand.u32 %s121, 1
          %s774 = scalar_lea.sflag [#allocation6], %s773
          %s775 = sand.u32 %s121, 1
          %s776 = smul.addr %s775, 2
          %s777 = scalar_lea.vmem [#allocation5], %s776
          %778 = dma.done %s774, 32
        $region56: #{head_forward_seq.1} parent=51 // pred_fallthru
          _
        // Predicated region
        $region57: #{head_forward_seq.1} parent=51 // pred_check
          %p779 = pneg %p162
        $region58: #{head_forward_seq.1} parent=51 // pred_check_branch
          %781 = sbr.rel (%p779) target = $region60
        $region59: #{head_forward_seq.1} parent=51 // pred_region
          %s782 = sand.u32 %s147, 1
          %s783 = scalar_lea.sflag [#allocation8], %s782
          %s784 = sand.u32 %s147, 1
          %s785 = smul.addr %s784, 2
          %s786 = scalar_lea.vmem [#allocation7], %s785
          %787 = dma.done %s783, 32
        $region60: #{head_forward_seq.1} parent=51 // pred_fallthru
          _
      $region52: #{head_forward_seq.1} parent=5 // pred_fallthru
        _
    $region6: #{head_forward_seq.1} parent=1 // loop_footer
      %s22 = sadd.s32 1, %s18
    $region7: #{head_forward_seq.1} parent=1 // loop_footer_branch
      %17 = sbr.rel target = $region3
    $region8: #{head_forward_seq.1} parent=1 // loop_exit
      _
    %788 = vsyncpa [#allocation6], 1
    %s789 = scalar_lea.sflag [#allocation6], 1
    %790 = vsyncpa %s789, 1
    %791 = vsyncpa [#allocation8], 1
    %s792 = scalar_lea.sflag [#allocation8], 1
    %793 = vsyncpa %s792, 1

</llo_original>
